<compile_context>
chip_gen: v5e
topology: v5e:2x2
jax: 0.10.0
libtpu: 0.0.40
codegen_flags: <defaults>
</compile_context>

<pallas_src>
import functools

import jax
import jax.numpy as jnp
from jax import lax
from jax.experimental import pallas as pl
from jax.experimental.pallas import tpu as pltpu

_INV_SQRT2 = 0.7071067811865476
_SQRT_2_OVER_PI = 0.7978845608028654
_LANE = 128


def _gelu_exact(x):
    # PyTorch nn.GELU() default: exact erf-based GELU (computed in f32).
    return 0.5 * x * (1.0 + lax.erf(x * _INV_SQRT2))


def _gelu_tanh(x):
    # Optional tanh approximation (EUP path); opt-in only.
    return 0.5 * x * (1.0 + jnp.tanh(_SQRT_2_OVER_PI * (x + 0.044715 * x * x * x)))


def _make_kernel(gelu_fn):
    def kernel(x_ref, w1_ref, b1_ref, w2_ref, b2_ref, w3_ref, b3_ref, oT_ref):
        # x: (tb, in_size) natural layout; Wk: PyTorch (out_k, in_k); bk: (out_k, 1) f32
        x = x_ref[...]
        # W1 @ x^T  (q @ k^T pattern: contract last dims) -> (h1, tb), batch on lanes.
        h = lax.dot_general(w1_ref[...], x, (((1,), (1,)), ((), ())),
                            preferred_element_type=jnp.float32)
        h = gelu_fn(h + b1_ref[...])                       # f32 elementwise, full lanes
        h = jnp.dot(w2_ref[...], h.astype(w2_ref.dtype),
                    preferred_element_type=jnp.float32)
        h = gelu_fn(h + b2_ref[...])                       # f32 elementwise, full lanes
        h = jnp.dot(w3_ref[...], h.astype(w3_ref.dtype),
                    preferred_element_type=jnp.float32)
        oT_ref[...] = (h + b3_ref[...]).astype(oT_ref.dtype)
    return kernel


def _round_up(n, m):
    return ((n + m - 1) // m) * m


def _vmem_capacity_bytes():
    try:
        return int(pltpu.get_tpu_info().vmem_capacity_bytes)
    except Exception:
        return 64 * 1024 * 1024  # conservative (v7x per-TC figure)


def _is_multi_tensorcore():
    # Best-effort detection of multi-TensorCore parts (v7x); default False.
    try:
        kind = jax.local_devices()[0].device_kind.lower()
        return ("v7" in kind) or ("7x" in kind)
    except Exception:
        return False


@functools.partial(
    jax.jit,
    static_argnames=("tile_b", "compute_dtype", "approximate_gelu", "transposed_output"),
)
def mlp_forward(x, params, *, tile_b=None, compute_dtype=None,
                approximate_gelu=False, transposed_output=False):
    """x: (B, in_size). params: ((W1,b1),(W2,b2),(W3,b3)), W in PyTorch (out, in)
    layout. Returns (B, out_size) in x.dtype (or (out_size, B) if
    transposed_output=True, skipping the wrapper-side output transpose)."""
    (w1, b1), (w2, b2), (w3, b3) = params
    B, in_size = x.shape
    h1, h2, out_size = w1.shape[0], w2.shape[0], w3.shape[0]
    out_dtype = x.dtype

    # ---- operand dtypes ----------------------------------------------------
    mm_dtype = jnp.dtype(compute_dtype) if compute_dtype is not None else jnp.dtype(x.dtype)
    x_c = x if x.dtype == mm_dtype else x.astype(mm_dtype)   # opt-in; adds a pass
    w1c, w2c, w3c = (w.astype(mm_dtype) for w in (w1, w2, w3))
    b1c = b1.reshape(h1, 1).astype(jnp.float32)
    b2c = b2.reshape(h2, 1).astype(jnp.float32)
    b3c = b3.reshape(out_size, 1).astype(jnp.float32)

    # ---- batch tile selection (VMEM-budget derived, generation aware) -------
    x_isz = jnp.dtype(mm_dtype).itemsize
    o_isz = jnp.dtype(out_dtype).itemsize
    # per batch-row VMEM bytes: double-buffered x & out tiles + f32 intermediates
    bytes_per_row = 2 * in_size * x_isz + 2 * out_size * o_isz + 4 * (h1 + h2) + 64
    vmem_cap = _vmem_capacity_bytes()
    budget = min(max(vmem_cap // 3, 8 << 20), 48 << 20)
    tb_cap = max(_LANE, (budget // bytes_per_row) // _LANE * _LANE)

    tb = 4096 if tile_b is None else int(tile_b)
    tb = max(_LANE, min(_round_up(tb, _LANE), tb_cap))
    tb = min(tb, _round_up(B, _LANE))          # don't over-pad tiny batches
    B_pad = _round_up(B, tb)
    steps = B_pad // tb

    # v7x megacore: prefer an even step count so both TensorCores get work.
    if _is_multi_tensorcore() and steps > 1 and steps % 2 == 1:
        tb_even = _round_up(-(-B // (steps + 1)), _LANE)
        if tb_even >= _LANE:
            tb = tb_even
            B_pad = _round_up(B, tb)
            steps = B_pad // tb
    grid = (steps,)

    if B_pad != B:   # remainder-only pad; no-op for tile-aligned large batches
        x_c = jnp.pad(x_c, ((0, B_pad - B), (0, 0)))

    # ---- cost estimate & VMEM limit -----------------------------------------
    flops = 2 * B_pad * (in_size * h1 + h1 * h2 + h2 * out_size)
    transcendentals = B_pad * (h1 + h2)
    weight_bytes = (h1 * in_size + h2 * h1 + out_size * h2) * x_isz + (h1 + h2 + out_size) * 4
    bytes_accessed = in_size * B_pad * x_isz + out_size * B_pad * o_isz + weight_bytes
    vmem_need = bytes_per_row * tb + 2 * weight_bytes + (1 << 20)
    vmem_limit = int(min(max(32 << 20, 2 * vmem_need), 48 << 20))

    kernel = _make_kernel(_gelu_tanh if approximate_gelu else _gelu_exact)
    full = lambda i: (0, 0)  # weights / biases: same whole block every step

    oT = pl.pallas_call(
        kernel,
        out_shape=jax.ShapeDtypeStruct((out_size, B_pad), out_dtype),
        grid_spec=pltpu.PrefetchScalarGridSpec(
            num_scalar_prefetch=0,
            grid=grid,
            in_specs=[
                pl.BlockSpec((tb, in_size), lambda i: (i, 0)),   # x tile (natural)
                pl.BlockSpec((h1, in_size), full),               # W1
                pl.BlockSpec((h1, 1), full),                     # b1
                pl.BlockSpec((h2, h1), full),                    # W2
                pl.BlockSpec((h2, 1), full),                     # b2
                pl.BlockSpec((out_size, h2), full),              # W3
                pl.BlockSpec((out_size, 1), full),               # b3
            ],
            out_specs=pl.BlockSpec((out_size, tb), lambda i: (0, i)),  # lane-dense
        ),
        compiler_params=pltpu.CompilerParams(
            dimension_semantics=("parallel",),
            vmem_limit_bytes=vmem_limit,
        ),
        cost_estimate=pl.CostEstimate(
            flops=flops,
            transcendentals=transcendentals,
            bytes_accessed=bytes_accessed,
        ),
    )(x_c, w1c, b1c, w2c, b2c, w3c, b3c)

    if transposed_output:
        return oT[:, :B]
    return oT.T[:B]   # tiny (out_size x B) transpose; review-sanctioned


def init_mlp_params(key, in_size, out_size, net_arch, dtype=jnp.float32):
    """Deterministic PyTorch-style Linear init; weights in (out, in) layout."""
    dims = [in_size] + list(net_arch) + [out_size]
    params = []
    for fan_in, fan_out in zip(dims[:-1], dims[1:]):
        key, kw, kb = jax.random.split(key, 3)
        bound = 1.0 / float(fan_in) ** 0.5
        w = jax.random.uniform(kw, (fan_out, fan_in), dtype, -bound, bound)
        b = jax.random.uniform(kb, (fan_out,), dtype, -bound, bound)
        params.append((w, b))
    return tuple(params)


def mlp_reference(x, params):
    """Pure-JAX reference matching the PyTorch Sequential."""
    (w1, b1), (w2, b2), (w3, b3) = params
    h = _gelu_exact(x @ w1.T + b1)
    h = _gelu_exact(h @ w2.T + b2)
    return h @ w3.T + b3


if __name__ == "__main__":
    # Mlp(in_size=32, out_size=16, net_arch=[64, 64])
    in_size, out_size, net_arch = 32, 16, [64, 64]

    key = jax.random.PRNGKey(0)
    key, kx1, kx2 = jax.random.split(key, 3)
    params = init_mlp_params(key, in_size, out_size, net_arch)

    # --- small batch (single 128-lane tile after padding), f32 exact --------
    x_small = jax.random.normal(kx1, (8, in_size), dtype=jnp.float32)
    out_small = jax.block_until_ready(mlp_forward(x_small, params))
    ref_small = mlp_reference(x_small, params)
    assert out_small.shape == (8, out_size)
    assert jnp.allclose(out_small, ref_small, atol=1e-5, rtol=1e-5), float(
        jnp.max(jnp.abs(out_small - ref_small)))

    # --- ragged batch, multi-step grid, f32 exact ----------------------------
    x_big = jax.random.normal(kx2, (300, in_size), dtype=jnp.float32)
    out_big = jax.block_until_ready(mlp_forward(x_big, params, tile_b=128))
    ref_big = mlp_reference(x_big, params)
    assert out_big.shape == (300, out_size)
    assert jnp.allclose(out_big, ref_big, atol=1e-5, rtol=1e-5), float(
        jnp.max(jnp.abs(out_big - ref_big)))

    # --- opt-in bf16 operand streaming (f32 accumulation + f32 GELU) --------
    out_bf16 = jax.block_until_ready(
        mlp_forward(x_big, params, tile_b=128, compute_dtype=jnp.bfloat16))
    assert jnp.allclose(out_bf16, ref_big, atol=3e-2, rtol=3e-2), float(
        jnp.max(jnp.abs(out_bf16 - ref_big)))

    # --- transposed-output path (no wrapper-side output transpose at all) ---
    out_t = jax.block_until_ready(
        mlp_forward(x_big, params, tile_b=256, transposed_output=True))
    assert out_t.shape == (out_size, 300)
    assert jnp.allclose(out_t.T, ref_big, atol=1e-5, rtol=1e-5), float(
        jnp.max(jnp.abs(out_t.T - ref_big)))

    print("KERNEL_OK")
</pallas_src>

<mosaic_0001>
module attributes {stable_mosaic.version = 11 : i64} {
  func.func @kernel(%arg0: i32, %arg1: memref<128x32xf32, #tpu.memory_space<vmem>>, %arg2: memref<64x32xf32, #tpu.memory_space<vmem>>, %arg3: memref<64x1xf32, #tpu.memory_space<vmem>>, %arg4: memref<64x64xf32, #tpu.memory_space<vmem>>, %arg5: memref<64x1xf32, #tpu.memory_space<vmem>>, %arg6: memref<16x64xf32, #tpu.memory_space<vmem>>, %arg7: memref<16x1xf32, #tpu.memory_space<vmem>>, %arg8: memref<16x128xf32, #tpu.memory_space<vmem>>) attributes {dimension_semantics = [#tpu.dimension_semantics<parallel>], iteration_bounds = array<i64: 1>, scalar_prefetch = 0 : i64, scratch_operands = 0 : i64, tpu.core_type = #tpu.core_type<tc>, window_params = [{transform_indices = @transform_0, window_bounds = array<i64: 128, 32>}, {pipeline_mode = #tpu.pipeline_mode<synchronous>, transform_indices = @transform_1, window_bounds = array<i64: 64, 32>}, {pipeline_mode = #tpu.pipeline_mode<synchronous>, transform_indices = @transform_2, window_bounds = array<i64: 64, 1>}, {pipeline_mode = #tpu.pipeline_mode<synchronous>, transform_indices = @transform_3, window_bounds = array<i64: 64, 64>}, {pipeline_mode = #tpu.pipeline_mode<synchronous>, transform_indices = @transform_4, window_bounds = array<i64: 64, 1>}, {pipeline_mode = #tpu.pipeline_mode<synchronous>, transform_indices = @transform_5, window_bounds = array<i64: 16, 64>}, {pipeline_mode = #tpu.pipeline_mode<synchronous>, transform_indices = @transform_6, window_bounds = array<i64: 16, 1>}, {transform_indices = @transform_7, window_bounds = array<i64: 16, 128>}]} {
    %c0 = arith.constant 0 : index
    %c0_0 = arith.constant 0 : index
    %0 = vector.load %arg1[%c0, %c0_0] : memref<128x32xf32, #tpu.memory_space<vmem>>, vector<128x32xf32>
    %c0_1 = arith.constant 0 : index
    %c0_2 = arith.constant 0 : index
    %1 = vector.load %arg2[%c0_1, %c0_2] : memref<64x32xf32, #tpu.memory_space<vmem>>, vector<64x32xf32>
    %cst = arith.constant dense<0.000000e+00> : vector<64x128xf32>
    %2 = tpu.matmul %1, %0, %cst {dimension_numbers = #tpu.dot_dimension_numbers<[1], [1], [0], [0], [0, 0, 1, 0], [], []>} : vector<64x32xf32>, vector<128x32xf32>, vector<64x128xf32> -> vector<64x128xf32>
    %c0_3 = arith.constant 0 : index
    %c0_4 = arith.constant 0 : index
    %3 = vector.load %arg3[%c0_3, %c0_4] : memref<64x1xf32, #tpu.memory_space<vmem>>, vector<64x1xf32>
    %4 = vector.broadcast %3 : vector<64x1xf32> to vector<64x128xf32>
    %5 = arith.addf %2, %4 : vector<64x128xf32>
    %cst_5 = arith.constant 5.000000e-01 : f32
    %6 = vector.broadcast %cst_5 : f32 to vector<64x128xf32>
    %7 = arith.mulf %6, %5 : vector<64x128xf32>
    %cst_6 = arith.constant 0.707106769 : f32
    %8 = vector.broadcast %cst_6 : f32 to vector<64x128xf32>
    %9 = arith.mulf %5, %8 : vector<64x128xf32>
    %10 = math.erf %9 : vector<64x128xf32>
    %cst_7 = arith.constant 1.000000e+00 : f32
    %11 = vector.broadcast %cst_7 : f32 to vector<64x128xf32>
    %12 = arith.addf %11, %10 : vector<64x128xf32>
    %13 = arith.mulf %7, %12 : vector<64x128xf32>
    %c0_8 = arith.constant 0 : index
    %c0_9 = arith.constant 0 : index
    %14 = vector.load %arg4[%c0_8, %c0_9] : memref<64x64xf32, #tpu.memory_space<vmem>>, vector<64x64xf32>
    %cst_10 = arith.constant dense<0.000000e+00> : vector<64x128xf32>
    %15 = tpu.matmul %14, %13, %cst_10 {dimension_numbers = #tpu.dot_dimension_numbers<[1], [0], [0], [1], [0, 0, 1, 1], [], []>} : vector<64x64xf32>, vector<64x128xf32>, vector<64x128xf32> -> vector<64x128xf32>
    %c0_11 = arith.constant 0 : index
    %c0_12 = arith.constant 0 : index
    %16 = vector.load %arg5[%c0_11, %c0_12] : memref<64x1xf32, #tpu.memory_space<vmem>>, vector<64x1xf32>
    %17 = vector.broadcast %16 : vector<64x1xf32> to vector<64x128xf32>
    %18 = arith.addf %15, %17 : vector<64x128xf32>
    %cst_13 = arith.constant 5.000000e-01 : f32
    %19 = vector.broadcast %cst_13 : f32 to vector<64x128xf32>
    %20 = arith.mulf %19, %18 : vector<64x128xf32>
    %cst_14 = arith.constant 0.707106769 : f32
    %21 = vector.broadcast %cst_14 : f32 to vector<64x128xf32>
    %22 = arith.mulf %18, %21 : vector<64x128xf32>
    %23 = math.erf %22 : vector<64x128xf32>
    %cst_15 = arith.constant 1.000000e+00 : f32
    %24 = vector.broadcast %cst_15 : f32 to vector<64x128xf32>
    %25 = arith.addf %24, %23 : vector<64x128xf32>
    %26 = arith.mulf %20, %25 : vector<64x128xf32>
    %c0_16 = arith.constant 0 : index
    %c0_17 = arith.constant 0 : index
    %27 = vector.load %arg6[%c0_16, %c0_17] : memref<16x64xf32, #tpu.memory_space<vmem>>, vector<16x64xf32>
    %cst_18 = arith.constant dense<0.000000e+00> : vector<16x128xf32>
    %28 = tpu.matmul %27, %26, %cst_18 {dimension_numbers = #tpu.dot_dimension_numbers<[1], [0], [0], [1], [0, 0, 1, 1], [], []>} : vector<16x64xf32>, vector<64x128xf32>, vector<16x128xf32> -> vector<16x128xf32>
    %c0_19 = arith.constant 0 : index
    %c0_20 = arith.constant 0 : index
    %29 = vector.load %arg7[%c0_19, %c0_20] : memref<16x1xf32, #tpu.memory_space<vmem>>, vector<16x1xf32>
    %30 = vector.broadcast %29 : vector<16x1xf32> to vector<16x128xf32>
    %31 = arith.addf %28, %30 : vector<16x128xf32>
    %c0_21 = arith.constant 0 : index
    %c0_22 = arith.constant 0 : index
    %32 = vector.load %arg8[%c0_21, %c0_22] : memref<16x128xf32, #tpu.memory_space<vmem>>, vector<16x128xf32>
    tpu.vector_store %arg8[%c0_21, %c0_22], %31 {strides = array<i32>} : memref<16x128xf32, #tpu.memory_space<vmem>>, vector<16x128xf32>,
    return
  }
  func.func @transform_0(%arg0: i32) -> (i32, i32) {
    %c0_i32 = arith.constant 0 : i32
    %c0_i32_0 = arith.constant 0 : i32
    return %arg0, %c0_i32 : i32, i32
  }
  func.func @transform_1(%arg0: i32) -> (i32, i32) {
    %c0_i32 = arith.constant 0 : i32
    %c0_i32_0 = arith.constant 0 : i32
    %c0_i32_1 = arith.constant 0 : i32
    return %c0_i32, %c0_i32_0 : i32, i32
  }
  func.func @transform_2(%arg0: i32) -> (i32, i32) {
    %c0_i32 = arith.constant 0 : i32
    %c0_i32_0 = arith.constant 0 : i32
    %c0_i32_1 = arith.constant 0 : i32
    return %c0_i32, %c0_i32_0 : i32, i32
  }
  func.func @transform_3(%arg0: i32) -> (i32, i32) {
    %c0_i32 = arith.constant 0 : i32
    %c0_i32_0 = arith.constant 0 : i32
    %c0_i32_1 = arith.constant 0 : i32
    return %c0_i32, %c0_i32_0 : i32, i32
  }
  func.func @transform_4(%arg0: i32) -> (i32, i32) {
    %c0_i32 = arith.constant 0 : i32
    %c0_i32_0 = arith.constant 0 : i32
    %c0_i32_1 = arith.constant 0 : i32
    return %c0_i32, %c0_i32_0 : i32, i32
  }
  func.func @transform_5(%arg0: i32) -> (i32, i32) {
    %c0_i32 = arith.constant 0 : i32
    %c0_i32_0 = arith.constant 0 : i32
    %c0_i32_1 = arith.constant 0 : i32
    return %c0_i32, %c0_i32_0 : i32, i32
  }
  func.func @transform_6(%arg0: i32) -> (i32, i32) {
    %c0_i32 = arith.constant 0 : i32
    %c0_i32_0 = arith.constant 0 : i32
    %c0_i32_1 = arith.constant 0 : i32
    return %c0_i32, %c0_i32_0 : i32, i32
  }
  func.func @transform_7(%arg0: i32) -> (i32, i32) {
    %c0_i32 = arith.constant 0 : i32
    %c0_i32_0 = arith.constant 0 : i32
    return %c0_i32, %arg0 : i32, i32
  }
}

</mosaic_0001>

<llo_original>
// kernel: mlp_forward.1
$region0: #{mlp_forward.1}
  #allocation0 [shape = 'u32[]', space=smem, size = 0x4, offset = 0x4, fixed_abs, tag = 'smem constant byte address 0x4 - core index']
  #allocation1 [shape = 'u32[72,128]{1,0:T(1,128)}', space=vmem, size = 0x9000, scoped, tag = 'internal scratch']
  %s0 = inlined_call_operand.vmem [shape: f32[128,32], index: 0, kind: input, shape index: {}]
  %s1 = inlined_call_operand.vmem [shape: f32[64,32], index: 1, kind: input, shape index: {}]
  %s2 = inlined_call_operand.vmem [shape: f32[64,1], index: 2, kind: input, shape index: {}]
  %s3 = inlined_call_operand.vmem [shape: f32[64,64], index: 3, kind: input, shape index: {}]
  %s4 = inlined_call_operand.vmem [shape: f32[64,1], index: 4, kind: input, shape index: {}]
  %s5 = inlined_call_operand.vmem [shape: f32[16,64], index: 5, kind: input, shape index: {}]
  %s6 = inlined_call_operand.vmem [shape: f32[16,1], index: 6, kind: input, shape index: {}]
  %s7 = inlined_call_operand.vmem [shape: f32[16,128], index: 7, kind: output, shape index: {}]
  %s8 = sld [smem:[#allocation0]]
  $region38: #{mlp_forward.1} parent=0
    _
  %s10 = ssub.s32 1, %s8
  %s11 = scalar_select 0, %s10, %s8
  // Predicated region
  $region2: #{mlp_forward.1} parent=0 // pred_check
    _
  $region3: #{mlp_forward.1} parent=0 // pred_check_branch
    %13 = sbr.rel (0) target = $region5
  $region4: #{mlp_forward.1} parent=0 // pred_region
    _
  $region5: #{mlp_forward.1} parent=0 // pred_fallthru
    _
  // Predicated region
  $region6: #{mlp_forward.1} parent=0 // pred_check
    _
  $region7: #{mlp_forward.1} parent=0 // pred_check_branch
    %15 = sbr.rel (0) target = $region9
  $region8: #{mlp_forward.1} parent=0 // pred_region
    _
  $region9: #{mlp_forward.1} parent=0 // pred_fallthru
    _
  // Predicated region
  $region10: #{mlp_forward.1} parent=0 // pred_check
    _
  $region11: #{mlp_forward.1} parent=0 // pred_check_branch
    %17 = sbr.rel (0) target = $region13
  $region12: #{mlp_forward.1} parent=0 // pred_region
    _
  $region13: #{mlp_forward.1} parent=0 // pred_fallthru
    _
  // Predicated region
  $region14: #{mlp_forward.1} parent=0 // pred_check
    _
  $region15: #{mlp_forward.1} parent=0 // pred_check_branch
    %19 = sbr.rel (0) target = $region17
  $region16: #{mlp_forward.1} parent=0 // pred_region
    _
  $region17: #{mlp_forward.1} parent=0 // pred_fallthru
    _
  // Predicated region
  $region18: #{mlp_forward.1} parent=0 // pred_check
    _
  $region19: #{mlp_forward.1} parent=0 // pred_check_branch
    %21 = sbr.rel (0) target = $region21
  $region20: #{mlp_forward.1} parent=0 // pred_region
    _
  $region21: #{mlp_forward.1} parent=0 // pred_fallthru
    _
  // Predicated region
  $region22: #{mlp_forward.1} parent=0 // pred_check
    _
  $region23: #{mlp_forward.1} parent=0 // pred_check_branch
    %23 = sbr.rel (0) target = $region25
  $region24: #{mlp_forward.1} parent=0 // pred_region
    _
  $region25: #{mlp_forward.1} parent=0 // pred_fallthru
    _
  // Predicated region
  $region26: #{mlp_forward.1} parent=0 // pred_check
    _
  $region27: #{mlp_forward.1} parent=0 // pred_check_branch
    %25 = sbr.rel (0) target = $region29
  $region28: #{mlp_forward.1} parent=0 // pred_region
    _
  $region29: #{mlp_forward.1} parent=0 // pred_fallthru
    _
  %v26 = vld [vmem:[%s0] sm:$0xff]
  %v27 = vld [vmem:[%s0 + $0x8] sm:$0xff]
  %v28 = vld [vmem:[%s0 + $0x10] sm:$0xff]
  %v29 = vld [vmem:[%s0 + $0x18] sm:$0xff]
  %v30 = vld [vmem:[%s0 + $0x20] sm:$0xff]
  %v31 = vld [vmem:[%s0 + $0x28] sm:$0xff]
  %v32 = vld [vmem:[%s0 + $0x30] sm:$0xff]
  %v33 = vld [vmem:[%s0 + $0x38] sm:$0xff]
  %v34 = vld [vmem:[%s0 + $0x40] sm:$0xff]
  %v35 = vld [vmem:[%s0 + $0x48] sm:$0xff]
  %v36 = vld [vmem:[%s0 + $0x50] sm:$0xff]
  %v37 = vld [vmem:[%s0 + $0x58] sm:$0xff]
  %v38 = vld [vmem:[%s0 + $0x60] sm:$0xff]
  %v39 = vld [vmem:[%s0 + $0x68] sm:$0xff]
  %v40 = vld [vmem:[%s0 + $0x70] sm:$0xff]
  %v41 = vld [vmem:[%s0 + $0x78] sm:$0xff]
  %v42 = vld [vmem:[%s1] sm:$0xff]
  %v43 = vld [vmem:[%s1 + $0x8] sm:$0xff]
  %v44 = vld [vmem:[%s1 + $0x10] sm:$0xff]
  %v45 = vld [vmem:[%s1 + $0x18] sm:$0xff]
  %v46 = vld [vmem:[%s1 + $0x20] sm:$0xff]
  %v47 = vld [vmem:[%s1 + $0x28] sm:$0xff]
  %v48 = vld [vmem:[%s1 + $0x30] sm:$0xff]
  %v49 = vld [vmem:[%s1 + $0x38] sm:$0xff]
  %v50 = vld [vmem:[%s2] sm:$0xff]
  %v51 = vld [vmem:[%s2 + $0x8] sm:$0xff]
  %v52 = vld [vmem:[%s2 + $0x10] sm:$0xff]
  %v53 = vld [vmem:[%s2 + $0x18] sm:$0xff]
  %v54 = vld [vmem:[%s2 + $0x20] sm:$0xff]
  %v55 = vld [vmem:[%s2 + $0x28] sm:$0xff]
  %v56 = vld [vmem:[%s2 + $0x30] sm:$0xff]
  %v57 = vld [vmem:[%s2 + $0x38] sm:$0xff]
  %59 = vset.pattern.permute.xlu0 0
  %60 = vperm.xlu0 %59, %v50
  %v61 = vpop.permute.xlu0 %60
  %64 = vset.pattern.permute.xlu0 0
  %65 = vperm.xlu0 %64, %v51
  %v66 = vpop.permute.xlu0 %65
  %69 = vset.pattern.permute.xlu0 0
  %70 = vperm.xlu0 %69, %v52
  %v71 = vpop.permute.xlu0 %70
  %74 = vset.pattern.permute.xlu0 0
  %75 = vperm.xlu0 %74, %v53
  %v76 = vpop.permute.xlu0 %75
  %79 = vset.pattern.permute.xlu0 0
  %80 = vperm.xlu0 %79, %v54
  %v81 = vpop.permute.xlu0 %80
  %84 = vset.pattern.permute.xlu0 0
  %85 = vperm.xlu0 %84, %v55
  %v86 = vpop.permute.xlu0 %85
  %89 = vset.pattern.permute.xlu0 0
  %90 = vperm.xlu0 %89, %v56
  %v91 = vpop.permute.xlu0 %90
  %94 = vset.pattern.permute.xlu0 0
  %95 = vperm.xlu0 %94, %v57
  %v96 = vpop.permute.xlu0 %95
  %vm98 = vcmask 261120
  %v100 = vsel %vm98, %v42, 0
  %v103 = vsel %vm98, %v43, 0
  %v106 = vsel %vm98, %v44, 0
  %v109 = vsel %vm98, %v45, 0
  %v112 = vsel %vm98, %v46, 0
  %v115 = vsel %vm98, %v47, 0
  %v118 = vsel %vm98, %v48, 0
  %v121 = vsel %vm98, %v49, 0
  %v124 = vsel %vm98, %v26, 0
  %v127 = vsel %vm98, %v27, 0
  %v130 = vsel %vm98, %v28, 0
  %v133 = vsel %vm98, %v29, 0
  %v136 = vsel %vm98, %v30, 0
  %v139 = vsel %vm98, %v31, 0
  %v142 = vsel %vm98, %v32, 0
  %v145 = vsel %vm98, %v33, 0
  %v148 = vsel %vm98, %v34, 0
  %v151 = vsel %vm98, %v35, 0
  %v154 = vsel %vm98, %v36, 0
  %v157 = vsel %vm98, %v37, 0
  %v160 = vsel %vm98, %v38, 0
  %v163 = vsel %vm98, %v39, 0
  %v166 = vsel %vm98, %v40, 0
  %v169 = vsel %vm98, %v41, 0
  %171 = vmatpush.xpose.msra.mxu0 %v169
  %172 = vmatpush.xpose.msra.mxu0 %v166
  %173 = vmatpush.xpose.msra.mxu0 %v163
  %174 = vmatpush.xpose.msra.mxu0 %v160
  %175 = vmatpush.xpose.msra.mxu0 %v157
  %176 = vmatpush.xpose.msra.mxu0 %v154
  %177 = vmatpush.xpose.msra.mxu0 %v151
  %178 = vmatpush.xpose.msra.mxu0 %v148
  %179 = vmatpush.xpose.msra.mxu0 %v145
  %180 = vmatpush.xpose.msra.mxu0 %v142
  %181 = vmatpush.xpose.msra.mxu0 %v139
  %182 = vmatpush.xpose.msra.mxu0 %v136
  %183 = vmatpush.xpose.msra.mxu0 %v133
  %184 = vmatpush.xpose.msra.mxu0 %v130
  %185 = vmatpush.xpose.msra.mxu0 %v127
  %186 = vmatpush.xpose.msra.mxu0 %v124
  %187 = vmatmul.f32.gmra.mxu0 %v100
  %v188 = vpop.f32.mrf.mxu0
  %v189 = vadd.f32 %v61, %v188
  %190 = vmatmul.f32.gmra.mxu0 %v103
  %v191 = vpop.f32.mrf.mxu0
  %v192 = vadd.f32 %v66, %v191
  %193 = vmatmul.f32.gmra.mxu0 %v106
  %v194 = vpop.f32.mrf.mxu0
  %v195 = vadd.f32 %v71, %v194
  %196 = vmatmul.f32.gmra.mxu0 %v109
  %v197 = vpop.f32.mrf.mxu0
  %v198 = vadd.f32 %v76, %v197
  %199 = vmatmul.f32.gmra.mxu0 %v112
  %v200 = vpop.f32.mrf.mxu0
  %v201 = vadd.f32 %v81, %v200
  %202 = vmatmul.f32.gmra.mxu0 %v115
  %v203 = vpop.f32.mrf.mxu0
  %v204 = vadd.f32 %v86, %v203
  %205 = vmatmul.f32.gmra.mxu0 %v118
  %v206 = vpop.f32.mrf.mxu0
  %v207 = vadd.f32 %v91, %v206
  %208 = vmatmul.f32.gmra.mxu0 %v121
  %v209 = vpop.f32.mrf.mxu0
  %v210 = vadd.f32 %v96, %v209
  %211 = vdwg.mxu0
  %v212 = vmul.f32 %v189, 0.5
  %v213 = vmul.f32 %v192, 0.5
  %v214 = vmul.f32 %v195, 0.5
  %v215 = vmul.f32 %v198, 0.5
  %v216 = vmul.f32 %v201, 0.5
  %v217 = vmul.f32 %v204, 0.5
  %v218 = vmul.f32 %v207, 0.5
  %v219 = vmul.f32 %v210, 0.5
  %v220 = vmul.f32 %v189, 0.70710677
  %v221 = vmul.f32 %v192, 0.70710677
  %v222 = vmul.f32 %v195, 0.70710677
  %v223 = vmul.f32 %v198, 0.70710677
  %v224 = vmul.f32 %v201, 0.70710677
  %v225 = vmul.f32 %v204, 0.70710677
  %v226 = vmul.f32 %v207, 0.70710677
  %v227 = vmul.f32 %v210, 0.70710677
  %v228 = vmul.f32 %v220, %v220
  %v229 = vmin.f32 16.0, %v228
  %v230 = vmul.f32 %v229, 2.1237322e-06
  %v231 = vadd.f32 %v230, 0.00028619796
  %v232 = vmul.f32 %v229, %v231
  %v233 = vadd.f32 %v232, 0.0036580483
  %v234 = vmul.f32 %v229, %v233
  %v235 = vadd.f32 %v234, 0.05243302
  %v236 = vmul.f32 %v229, %v235
  %v237 = vadd.f32 %v236, 0.18741608
  %v238 = vmul.f32 %v229, %v237
  %v239 = vadd.f32 %v238, 1.1283791
  %v240 = vmul.f32 %v220, %v239
  %v241 = vmul.f32 %v229, 3.8918573e-05
  %v242 = vadd.f32 %v241, 0.001143296
  %v243 = vmul.f32 %v229, %v242
  %v244 = vadd.f32 %v243, 0.014752088
  %v245 = vmul.f32 %v229, %v244
  %v246 = vadd.f32 %v245, 0.112945676
  %v247 = vmul.f32 %v229, %v246
  %v248 = vadd.f32 %v247, 0.4994258
  %v249 = vmul.f32 %v229, %v248
  %v250 = vadd.f32 %v249, 1.0
  %v251 = vrcp.pop %v250
  %v252 = vmul.f32 %v250, %v251
  %v253 = vsub.f32 1.0, %v252
  %v254 = vmul.f32 %v251, %v253
  %v255 = vadd.f32 %v251, %v254
  %vm256 = vweird.f32 %v250
  %vm257 = vweird.f32 %v251
  %vm258 = vmor %vm256, %vm257
  %v259 = vsel %vm258, %v251, %v255
  %v260 = vand.u32 2147483647, %v250
  %vm261 = vcmp.eq.f32.partialorder %v260, 8.507059e+37
  %v262 = vand.u32 %v250, 2147483648
  %v263 = vor.u32 1.1754944e-38, %v262
  %v264 = vsel %vm261, %v263, %v259
  %v265 = vmul.f32 %v240, %v264
  %v266 = vmin.f32 %v265, 1.0
  %v267 = vmax.f32 %v266, -1.0
  %v268 = vmul.f32 %v221, %v221
  %v269 = vmin.f32 16.0, %v268
  %v270 = vmul.f32 %v269, 2.1237322e-06
  %v271 = vadd.f32 %v270, 0.00028619796
  %v272 = vmul.f32 %v269, %v271
  %v273 = vadd.f32 %v272, 0.0036580483
  %v274 = vmul.f32 %v269, %v273
  %v275 = vadd.f32 %v274, 0.05243302
  %v276 = vmul.f32 %v269, %v275
  %v277 = vadd.f32 %v276, 0.18741608
  %v278 = vmul.f32 %v269, %v277
  %v279 = vadd.f32 %v278, 1.1283791
  %v280 = vmul.f32 %v221, %v279
  %v281 = vmul.f32 %v269, 3.8918573e-05
  %v282 = vadd.f32 %v281, 0.001143296
  %v283 = vmul.f32 %v269, %v282
  %v284 = vadd.f32 %v283, 0.014752088
  %v285 = vmul.f32 %v269, %v284
  %v286 = vadd.f32 %v285, 0.112945676
  %v287 = vmul.f32 %v269, %v286
  %v288 = vadd.f32 %v287, 0.4994258
  %v289 = vmul.f32 %v269, %v288
  %v290 = vadd.f32 %v289, 1.0
  %v291 = vrcp.pop %v290
  %v292 = vmul.f32 %v290, %v291
  %v293 = vsub.f32 1.0, %v292
  %v294 = vmul.f32 %v291, %v293
  %v295 = vadd.f32 %v291, %v294
  %vm296 = vweird.f32 %v290
  %vm297 = vweird.f32 %v291
  %vm298 = vmor %vm296, %vm297
  %v299 = vsel %vm298, %v291, %v295
  %v300 = vand.u32 2147483647, %v290
  %vm301 = vcmp.eq.f32.partialorder %v300, 8.507059e+37
  %v302 = vand.u32 %v290, 2147483648
  %v303 = vor.u32 1.1754944e-38, %v302
  %v304 = vsel %vm301, %v303, %v299
  %v305 = vmul.f32 %v280, %v304
  %v306 = vmin.f32 %v305, 1.0
  %v307 = vmax.f32 %v306, -1.0
  %v308 = vmul.f32 %v222, %v222
  %v309 = vmin.f32 16.0, %v308
  %v310 = vmul.f32 %v309, 2.1237322e-06
  %v311 = vadd.f32 %v310, 0.00028619796
  %v312 = vmul.f32 %v309, %v311
  %v313 = vadd.f32 %v312, 0.0036580483
  %v314 = vmul.f32 %v309, %v313
  %v315 = vadd.f32 %v314, 0.05243302
  %v316 = vmul.f32 %v309, %v315
  %v317 = vadd.f32 %v316, 0.18741608
  %v318 = vmul.f32 %v309, %v317
  %v319 = vadd.f32 %v318, 1.1283791
  %v320 = vmul.f32 %v222, %v319
  %v321 = vmul.f32 %v309, 3.8918573e-05
  %v322 = vadd.f32 %v321, 0.001143296
  %v323 = vmul.f32 %v309, %v322
  %v324 = vadd.f32 %v323, 0.014752088
  %v325 = vmul.f32 %v309, %v324
  %v326 = vadd.f32 %v325, 0.112945676
  %v327 = vmul.f32 %v309, %v326
  %v328 = vadd.f32 %v327, 0.4994258
  %v329 = vmul.f32 %v309, %v328
  %v330 = vadd.f32 %v329, 1.0
  %v331 = vrcp.pop %v330
  %v332 = vmul.f32 %v330, %v331
  %v333 = vsub.f32 1.0, %v332
  %v334 = vmul.f32 %v331, %v333
  %v335 = vadd.f32 %v331, %v334
  %vm336 = vweird.f32 %v330
  %vm337 = vweird.f32 %v331
  %vm338 = vmor %vm336, %vm337
  %v339 = vsel %vm338, %v331, %v335
  %v340 = vand.u32 2147483647, %v330
  %vm341 = vcmp.eq.f32.partialorder %v340, 8.507059e+37
  %v342 = vand.u32 %v330, 2147483648
  %v343 = vor.u32 1.1754944e-38, %v342
  %v344 = vsel %vm341, %v343, %v339
  %v345 = vmul.f32 %v320, %v344
  %v346 = vmin.f32 %v345, 1.0
  %v347 = vmax.f32 %v346, -1.0
  %v348 = vmul.f32 %v223, %v223
  %v349 = vmin.f32 16.0, %v348
  %v350 = vmul.f32 %v349, 2.1237322e-06
  %v351 = vadd.f32 %v350, 0.00028619796
  %v352 = vmul.f32 %v349, %v351
  %v353 = vadd.f32 %v352, 0.0036580483
  %v354 = vmul.f32 %v349, %v353
  %v355 = vadd.f32 %v354, 0.05243302
  %v356 = vmul.f32 %v349, %v355
  %v357 = vadd.f32 %v356, 0.18741608
  %v358 = vmul.f32 %v349, %v357
  %v359 = vadd.f32 %v358, 1.1283791
  %v360 = vmul.f32 %v223, %v359
  %v361 = vmul.f32 %v349, 3.8918573e-05
  %v362 = vadd.f32 %v361, 0.001143296
  %v363 = vmul.f32 %v349, %v362
  %v364 = vadd.f32 %v363, 0.014752088
  %v365 = vmul.f32 %v349, %v364
  %v366 = vadd.f32 %v365, 0.112945676
  %v367 = vmul.f32 %v349, %v366
  %v368 = vadd.f32 %v367, 0.4994258
  %v369 = vmul.f32 %v349, %v368
  %v370 = vadd.f32 %v369, 1.0
  %v371 = vrcp.pop %v370
  %v372 = vmul.f32 %v370, %v371
  %v373 = vsub.f32 1.0, %v372
  %v374 = vmul.f32 %v371, %v373
  %v375 = vadd.f32 %v371, %v374
  %vm376 = vweird.f32 %v370
  %vm377 = vweird.f32 %v371
  %vm378 = vmor %vm376, %vm377
  %v379 = vsel %vm378, %v371, %v375
  %v380 = vand.u32 2147483647, %v370
  %vm381 = vcmp.eq.f32.partialorder %v380, 8.507059e+37
  %v382 = vand.u32 %v370, 2147483648
  %v383 = vor.u32 1.1754944e-38, %v382
  %v384 = vsel %vm381, %v383, %v379
  %v385 = vmul.f32 %v360, %v384
  %v386 = vmin.f32 %v385, 1.0
  %v387 = vmax.f32 %v386, -1.0
  %v388 = vmul.f32 %v224, %v224
  %v389 = vmin.f32 16.0, %v388
  %v390 = vmul.f32 %v389, 2.1237322e-06
  %v391 = vadd.f32 %v390, 0.00028619796
  %v392 = vmul.f32 %v389, %v391
  %v393 = vadd.f32 %v392, 0.0036580483
  %v394 = vmul.f32 %v389, %v393
  %v395 = vadd.f32 %v394, 0.05243302
  %v396 = vmul.f32 %v389, %v395
  %v397 = vadd.f32 %v396, 0.18741608
  %v398 = vmul.f32 %v389, %v397
  %v399 = vadd.f32 %v398, 1.1283791
  %v400 = vmul.f32 %v224, %v399
  %v401 = vmul.f32 %v389, 3.8918573e-05
  %v402 = vadd.f32 %v401, 0.001143296
  %v403 = vmul.f32 %v389, %v402
  %v404 = vadd.f32 %v403, 0.014752088
  %v405 = vmul.f32 %v389, %v404
  %v406 = vadd.f32 %v405, 0.112945676
  %v407 = vmul.f32 %v389, %v406
  %v408 = vadd.f32 %v407, 0.4994258
  %v409 = vmul.f32 %v389, %v408
  %v410 = vadd.f32 %v409, 1.0
  %v411 = vrcp.pop %v410
  %v412 = vmul.f32 %v410, %v411
  %v413 = vsub.f32 1.0, %v412
  %v414 = vmul.f32 %v411, %v413
  %v415 = vadd.f32 %v411, %v414
  %vm416 = vweird.f32 %v410
  %vm417 = vweird.f32 %v411
  %vm418 = vmor %vm416, %vm417
  %v419 = vsel %vm418, %v411, %v415
  %v420 = vand.u32 2147483647, %v410
  %vm421 = vcmp.eq.f32.partialorder %v420, 8.507059e+37
  %v422 = vand.u32 %v410, 2147483648
  %v423 = vor.u32 1.1754944e-38, %v422
  %v424 = vsel %vm421, %v423, %v419
  %v425 = vmul.f32 %v400, %v424
  %v426 = vmin.f32 %v425, 1.0
  %v427 = vmax.f32 %v426, -1.0
  %v428 = vmul.f32 %v225, %v225
  %v429 = vmin.f32 16.0, %v428
  %v430 = vmul.f32 %v429, 2.1237322e-06
  %v431 = vadd.f32 %v430, 0.00028619796
  %v432 = vmul.f32 %v429, %v431
  %v433 = vadd.f32 %v432, 0.0036580483
  %v434 = vmul.f32 %v429, %v433
  %v435 = vadd.f32 %v434, 0.05243302
  %v436 = vmul.f32 %v429, %v435
  %v437 = vadd.f32 %v436, 0.18741608
  %v438 = vmul.f32 %v429, %v437
  %v439 = vadd.f32 %v438, 1.1283791
  %v440 = vmul.f32 %v225, %v439
  %v441 = vmul.f32 %v429, 3.8918573e-05
  %v442 = vadd.f32 %v441, 0.001143296
  %v443 = vmul.f32 %v429, %v442
  %v444 = vadd.f32 %v443, 0.014752088
  %v445 = vmul.f32 %v429, %v444
  %v446 = vadd.f32 %v445, 0.112945676
  %v447 = vmul.f32 %v429, %v446
  %v448 = vadd.f32 %v447, 0.4994258
  %v449 = vmul.f32 %v429, %v448
  %v450 = vadd.f32 %v449, 1.0
  %v451 = vrcp.pop %v450
  %v452 = vmul.f32 %v450, %v451
  %v453 = vsub.f32 1.0, %v452
  %v454 = vmul.f32 %v451, %v453
  %v455 = vadd.f32 %v451, %v454
  %vm456 = vweird.f32 %v450
  %vm457 = vweird.f32 %v451
  %vm458 = vmor %vm456, %vm457
  %v459 = vsel %vm458, %v451, %v455
  %v460 = vand.u32 2147483647, %v450
  %vm461 = vcmp.eq.f32.partialorder %v460, 8.507059e+37
  %v462 = vand.u32 %v450, 2147483648
  %v463 = vor.u32 1.1754944e-38, %v462
  %v464 = vsel %vm461, %v463, %v459
  %v465 = vmul.f32 %v440, %v464
  %v466 = vmin.f32 %v465, 1.0
  %v467 = vmax.f32 %v466, -1.0
  %v468 = vmul.f32 %v226, %v226
  %v469 = vmin.f32 16.0, %v468
  %v470 = vmul.f32 %v469, 2.1237322e-06
  %v471 = vadd.f32 %v470, 0.00028619796
  %v472 = vmul.f32 %v469, %v471
  %v473 = vadd.f32 %v472, 0.0036580483
  %v474 = vmul.f32 %v469, %v473
  %v475 = vadd.f32 %v474, 0.05243302
  %v476 = vmul.f32 %v469, %v475
  %v477 = vadd.f32 %v476, 0.18741608
  %v478 = vmul.f32 %v469, %v477
  %v479 = vadd.f32 %v478, 1.1283791
  %v480 = vmul.f32 %v226, %v479
  %v481 = vmul.f32 %v469, 3.8918573e-05
  %v482 = vadd.f32 %v481, 0.001143296
  %v483 = vmul.f32 %v469, %v482
  %v484 = vadd.f32 %v483, 0.014752088
  %v485 = vmul.f32 %v469, %v484
  %v486 = vadd.f32 %v485, 0.112945676
  %v487 = vmul.f32 %v469, %v486
  %v488 = vadd.f32 %v487, 0.4994258
  %v489 = vmul.f32 %v469, %v488
  %v490 = vadd.f32 %v489, 1.0
  %v491 = vrcp.pop %v490
  %v492 = vmul.f32 %v490, %v491
  %v493 = vsub.f32 1.0, %v492
  %v494 = vmul.f32 %v491, %v493
  %v495 = vadd.f32 %v491, %v494
  %vm496 = vweird.f32 %v490
  %vm497 = vweird.f32 %v491
  %vm498 = vmor %vm496, %vm497
  %v499 = vsel %vm498, %v491, %v495
  %v500 = vand.u32 2147483647, %v490
  %vm501 = vcmp.eq.f32.partialorder %v500, 8.507059e+37
  %v502 = vand.u32 %v490, 2147483648
  %v503 = vor.u32 1.1754944e-38, %v502
  %v504 = vsel %vm501, %v503, %v499
  %v505 = vmul.f32 %v480, %v504
  %v506 = vmin.f32 %v505, 1.0
  %v507 = vmax.f32 %v506, -1.0
  %v508 = vmul.f32 %v227, %v227
  %v509 = vmin.f32 16.0, %v508
  %v510 = vmul.f32 %v509, 2.1237322e-06
  %v511 = vadd.f32 %v510, 0.00028619796
  %v512 = vmul.f32 %v509, %v511
  %v513 = vadd.f32 %v512, 0.0036580483
  %v514 = vmul.f32 %v509, %v513
  %v515 = vadd.f32 %v514, 0.05243302
  %v516 = vmul.f32 %v509, %v515
  %v517 = vadd.f32 %v516, 0.18741608
  %v518 = vmul.f32 %v509, %v517
  %v519 = vadd.f32 %v518, 1.1283791
  %v520 = vmul.f32 %v227, %v519
  %v521 = vmul.f32 %v509, 3.8918573e-05
  %v522 = vadd.f32 %v521, 0.001143296
  %v523 = vmul.f32 %v509, %v522
  %v524 = vadd.f32 %v523, 0.014752088
  %v525 = vmul.f32 %v509, %v524
  %v526 = vadd.f32 %v525, 0.112945676
  %v527 = vmul.f32 %v509, %v526
  %v528 = vadd.f32 %v527, 0.4994258
  %v529 = vmul.f32 %v509, %v528
  %v530 = vadd.f32 %v529, 1.0
  %v531 = vrcp.pop %v530
  %v532 = vmul.f32 %v530, %v531
  %v533 = vsub.f32 1.0, %v532
  %v534 = vmul.f32 %v531, %v533
  %v535 = vadd.f32 %v531, %v534
  %vm536 = vweird.f32 %v530
  %vm537 = vweird.f32 %v531
  %vm538 = vmor %vm536, %vm537
  %v539 = vsel %vm538, %v531, %v535
  %v540 = vand.u32 2147483647, %v530
  %vm541 = vcmp.eq.f32.partialorder %v540, 8.507059e+37
  %v542 = vand.u32 %v530, 2147483648
  %v543 = vor.u32 1.1754944e-38, %v542
  %v544 = vsel %vm541, %v543, %v539
  %v545 = vmul.f32 %v520, %v544
  %v546 = vmin.f32 %v545, 1.0
  %v547 = vmax.f32 %v546, -1.0
  %v548 = vadd.f32 %v267, 1.0
  %v549 = vadd.f32 %v307, 1.0
  %v550 = vadd.f32 %v347, 1.0
  %v551 = vadd.f32 %v387, 1.0
  %v552 = vadd.f32 %v427, 1.0
  %v553 = vadd.f32 %v467, 1.0
  %v554 = vadd.f32 %v507, 1.0
  %v555 = vadd.f32 %v547, 1.0
  %v556 = vmul.f32 %v212, %v548
  %v557 = vmul.f32 %v213, %v549
  %v558 = vmul.f32 %v214, %v550
  %v559 = vmul.f32 %v215, %v551
  %v560 = vmul.f32 %v216, %v552
  %v561 = vmul.f32 %v217, %v553
  %v562 = vmul.f32 %v218, %v554
  %v563 = vmul.f32 %v219, %v555
  %v564 = vld [vmem:[%s3] sm:$0xff]
  %v565 = vld [vmem:[%s3 + $0x8] sm:$0xff]
  %v566 = vld [vmem:[%s3 + $0x10] sm:$0xff]
  %v567 = vld [vmem:[%s3 + $0x18] sm:$0xff]
  %v568 = vld [vmem:[%s3 + $0x20] sm:$0xff]
  %v569 = vld [vmem:[%s3 + $0x28] sm:$0xff]
  %v570 = vld [vmem:[%s3 + $0x30] sm:$0xff]
  %v571 = vld [vmem:[%s3 + $0x38] sm:$0xff]
  %v572 = vld [vmem:[%s4] sm:$0xff]
  %v573 = vld [vmem:[%s4 + $0x8] sm:$0xff]
  %v574 = vld [vmem:[%s4 + $0x10] sm:$0xff]
  %v575 = vld [vmem:[%s4 + $0x18] sm:$0xff]
  %v576 = vld [vmem:[%s4 + $0x20] sm:$0xff]
  %v577 = vld [vmem:[%s4 + $0x28] sm:$0xff]
  %v578 = vld [vmem:[%s4 + $0x30] sm:$0xff]
  %v579 = vld [vmem:[%s4 + $0x38] sm:$0xff]
  %581 = vset.pattern.permute.xlu0 0
  %582 = vperm.xlu0 %581, %v572
  %v583 = vpop.permute.xlu0 %582
  %586 = vset.pattern.permute.xlu0 0
  %587 = vperm.xlu0 %586, %v573
  %v588 = vpop.permute.xlu0 %587
  %591 = vset.pattern.permute.xlu0 0
  %592 = vperm.xlu0 %591, %v574
  %v593 = vpop.permute.xlu0 %592
  %596 = vset.pattern.permute.xlu0 0
  %597 = vperm.xlu0 %596, %v575
  %v598 = vpop.permute.xlu0 %597
  %601 = vset.pattern.permute.xlu0 0
  %602 = vperm.xlu0 %601, %v576
  %v603 = vpop.permute.xlu0 %602
  %606 = vset.pattern.permute.xlu0 0
  %607 = vperm.xlu0 %606, %v577
  %v608 = vpop.permute.xlu0 %607
  %611 = vset.pattern.permute.xlu0 0
  %612 = vperm.xlu0 %611, %v578
  %v613 = vpop.permute.xlu0 %612
  %616 = vset.pattern.permute.xlu0 0
  %617 = vperm.xlu0 %616, %v579
  %v618 = vpop.permute.xlu0 %617
  %vm620 = vcmask 523264
  %v622 = vsel %vm620, %v564, 0
  %v625 = vsel %vm620, %v565, 0
  %v628 = vsel %vm620, %v566, 0
  %v631 = vsel %vm620, %v567, 0
  %v634 = vsel %vm620, %v568, 0
  %v637 = vsel %vm620, %v569, 0
  %v640 = vsel %vm620, %v570, 0
  %v643 = vsel %vm620, %v571, 0
  %645 = vmatpush.msra.mxu0 0.0
  %646 = vmatpush.msra.mxu0 0.0
  %647 = vmatpush.msra.mxu0 0.0
  %648 = vmatpush.msra.mxu0 0.0
  %649 = vmatpush.msra.mxu0 0.0
  %650 = vmatpush.msra.mxu0 0.0
  %651 = vmatpush.msra.mxu0 0.0
  %652 = vmatpush.msra.mxu0 0.0
  %653 = vmatpush.msra.mxu0 %v563
  %654 = vmatpush.msra.mxu0 %v562
  %655 = vmatpush.msra.mxu0 %v561
  %656 = vmatpush.msra.mxu0 %v560
  %657 = vmatpush.msra.mxu0 %v559
  %658 = vmatpush.msra.mxu0 %v558
  %659 = vmatpush.msra.mxu0 %v557
  %660 = vmatpush.msra.mxu0 %v556
  %661 = vmatmul.f32.gmra.mxu0 %v622
  %v662 = vpop.f32.mrf.mxu0
  %v663 = vadd.f32 %v583, %v662
  %664 = vmatmul.f32.gmra.mxu0 %v625
  %v665 = vpop.f32.mrf.mxu0
  %v666 = vadd.f32 %v588, %v665
  %667 = vmatmul.f32.gmra.mxu0 %v628
  %v668 = vpop.f32.mrf.mxu0
  %v669 = vadd.f32 %v593, %v668
  %670 = vmatmul.f32.gmra.mxu0 %v631
  %v671 = vpop.f32.mrf.mxu0
  %v672 = vadd.f32 %v598, %v671
  %673 = vmatmul.f32.gmra.mxu0 %v634
  %v674 = vpop.f32.mrf.mxu0
  %v675 = vadd.f32 %v603, %v674
  %676 = vmatmul.f32.gmra.mxu0 %v637
  %v677 = vpop.f32.mrf.mxu0
  %v678 = vadd.f32 %v608, %v677
  %679 = vmatmul.f32.gmra.mxu0 %v640
  %v680 = vpop.f32.mrf.mxu0
  %v681 = vadd.f32 %v613, %v680
  %682 = vmatmul.f32.gmra.mxu0 %v643
  %v683 = vpop.f32.mrf.mxu0
  %v684 = vadd.f32 %v618, %v683
  %685 = vdwg.mxu0
  %v686 = vmul.f32 %v663, 0.5
  %v687 = vmul.f32 %v666, 0.5
  %v688 = vmul.f32 %v669, 0.5
  %v689 = vmul.f32 %v672, 0.5
  %v690 = vmul.f32 %v675, 0.5
  %v691 = vmul.f32 %v678, 0.5
  %v692 = vmul.f32 %v681, 0.5
  %v693 = vmul.f32 %v684, 0.5
  %v694 = vmul.f32 %v663, 0.70710677
  %v695 = vmul.f32 %v666, 0.70710677
  %v696 = vmul.f32 %v669, 0.70710677
  %v697 = vmul.f32 %v672, 0.70710677
  %v698 = vmul.f32 %v675, 0.70710677
  %v699 = vmul.f32 %v678, 0.70710677
  %v700 = vmul.f32 %v681, 0.70710677
  %v701 = vmul.f32 %v684, 0.70710677
  %v702 = vmul.f32 %v694, %v694
  %v703 = vmin.f32 16.0, %v702
  %v704 = vmul.f32 %v703, 2.1237322e-06
  %v705 = vadd.f32 %v704, 0.00028619796
  %v706 = vmul.f32 %v703, %v705
  %v707 = vadd.f32 %v706, 0.0036580483
  %v708 = vmul.f32 %v703, %v707
  %v709 = vadd.f32 %v708, 0.05243302
  %v710 = vmul.f32 %v703, %v709
  %v711 = vadd.f32 %v710, 0.18741608
  %v712 = vmul.f32 %v703, %v711
  %v713 = vadd.f32 %v712, 1.1283791
  %v714 = vmul.f32 %v694, %v713
  %v715 = vmul.f32 %v703, 3.8918573e-05
  %v716 = vadd.f32 %v715, 0.001143296
  %v717 = vmul.f32 %v703, %v716
  %v718 = vadd.f32 %v717, 0.014752088
  %v719 = vmul.f32 %v703, %v718
  %v720 = vadd.f32 %v719, 0.112945676
  %v721 = vmul.f32 %v703, %v720
  %v722 = vadd.f32 %v721, 0.4994258
  %v723 = vmul.f32 %v703, %v722
  %v724 = vadd.f32 %v723, 1.0
  %v725 = vrcp.pop %v724
  %v726 = vmul.f32 %v724, %v725
  %v727 = vsub.f32 1.0, %v726
  %v728 = vmul.f32 %v725, %v727
  %v729 = vadd.f32 %v725, %v728
  %vm730 = vweird.f32 %v724
  %vm731 = vweird.f32 %v725
  %vm732 = vmor %vm730, %vm731
  %v733 = vsel %vm732, %v725, %v729
  %v734 = vand.u32 2147483647, %v724
  %vm735 = vcmp.eq.f32.partialorder %v734, 8.507059e+37
  %v736 = vand.u32 %v724, 2147483648
  %v737 = vor.u32 1.1754944e-38, %v736
  %v738 = vsel %vm735, %v737, %v733
  %v739 = vmul.f32 %v714, %v738
  %v740 = vmin.f32 %v739, 1.0
  %v741 = vmax.f32 %v740, -1.0
  %v742 = vmul.f32 %v695, %v695
  %v743 = vmin.f32 16.0, %v742
  %v744 = vmul.f32 %v743, 2.1237322e-06
  %v745 = vadd.f32 %v744, 0.00028619796
  %v746 = vmul.f32 %v743, %v745
  %v747 = vadd.f32 %v746, 0.0036580483
  %v748 = vmul.f32 %v743, %v747
  %v749 = vadd.f32 %v748, 0.05243302
  %v750 = vmul.f32 %v743, %v749
  %v751 = vadd.f32 %v750, 0.18741608
  %v752 = vmul.f32 %v743, %v751
  %v753 = vadd.f32 %v752, 1.1283791
  %v754 = vmul.f32 %v695, %v753
  %v755 = vmul.f32 %v743, 3.8918573e-05
  %v756 = vadd.f32 %v755, 0.001143296
  %v757 = vmul.f32 %v743, %v756
  %v758 = vadd.f32 %v757, 0.014752088
  %v759 = vmul.f32 %v743, %v758
  %v760 = vadd.f32 %v759, 0.112945676
  %v761 = vmul.f32 %v743, %v760
  %v762 = vadd.f32 %v761, 0.4994258
  %v763 = vmul.f32 %v743, %v762
  %v764 = vadd.f32 %v763, 1.0
  %v765 = vrcp.pop %v764
  %v766 = vmul.f32 %v764, %v765
  %v767 = vsub.f32 1.0, %v766
  %v768 = vmul.f32 %v765, %v767
  %v769 = vadd.f32 %v765, %v768
  %vm770 = vweird.f32 %v764
  %vm771 = vweird.f32 %v765
  %vm772 = vmor %vm770, %vm771
  %v773 = vsel %vm772, %v765, %v769
  %v774 = vand.u32 2147483647, %v764
  %vm775 = vcmp.eq.f32.partialorder %v774, 8.507059e+37
  %v776 = vand.u32 %v764, 2147483648
  %v777 = vor.u32 1.1754944e-38, %v776
  %v778 = vsel %vm775, %v777, %v773
  %v779 = vmul.f32 %v754, %v778
  %v780 = vmin.f32 %v779, 1.0
  %v781 = vmax.f32 %v780, -1.0
  %v782 = vmul.f32 %v696, %v696
  %v783 = vmin.f32 16.0, %v782
  %v784 = vmul.f32 %v783, 2.1237322e-06
  %v785 = vadd.f32 %v784, 0.00028619796
  %v786 = vmul.f32 %v783, %v785
  %v787 = vadd.f32 %v786, 0.0036580483
  %v788 = vmul.f32 %v783, %v787
  %v789 = vadd.f32 %v788, 0.05243302
  %v790 = vmul.f32 %v783, %v789
  %v791 = vadd.f32 %v790, 0.18741608
  %v792 = vmul.f32 %v783, %v791
  %v793 = vadd.f32 %v792, 1.1283791
  %v794 = vmul.f32 %v696, %v793
  %v795 = vmul.f32 %v783, 3.8918573e-05
  %v796 = vadd.f32 %v795, 0.001143296
  %v797 = vmul.f32 %v783, %v796
  %v798 = vadd.f32 %v797, 0.014752088
  %v799 = vmul.f32 %v783, %v798
  %v800 = vadd.f32 %v799, 0.112945676
  %v801 = vmul.f32 %v783, %v800
  %v802 = vadd.f32 %v801, 0.4994258
  %v803 = vmul.f32 %v783, %v802
  %v804 = vadd.f32 %v803, 1.0
  %v805 = vrcp.pop %v804
  %v806 = vmul.f32 %v804, %v805
  %v807 = vsub.f32 1.0, %v806
  %v808 = vmul.f32 %v805, %v807
  %v809 = vadd.f32 %v805, %v808
  %vm810 = vweird.f32 %v804
  %vm811 = vweird.f32 %v805
  %vm812 = vmor %vm810, %vm811
  %v813 = vsel %vm812, %v805, %v809
  %v814 = vand.u32 2147483647, %v804
  %vm815 = vcmp.eq.f32.partialorder %v814, 8.507059e+37
  %v816 = vand.u32 %v804, 2147483648
  %v817 = vor.u32 1.1754944e-38, %v816
  %v818 = vsel %vm815, %v817, %v813
  %v819 = vmul.f32 %v794, %v818
  %v820 = vmin.f32 %v819, 1.0
  %v821 = vmax.f32 %v820, -1.0
  %v822 = vmul.f32 %v697, %v697
  %v823 = vmin.f32 16.0, %v822
  %v824 = vmul.f32 %v823, 2.1237322e-06
  %v825 = vadd.f32 %v824, 0.00028619796
  %v826 = vmul.f32 %v823, %v825
  %v827 = vadd.f32 %v826, 0.0036580483
  %v828 = vmul.f32 %v823, %v827
  %v829 = vadd.f32 %v828, 0.05243302
  %v830 = vmul.f32 %v823, %v829
  %v831 = vadd.f32 %v830, 0.18741608
  %v832 = vmul.f32 %v823, %v831
  %v833 = vadd.f32 %v832, 1.1283791
  %v834 = vmul.f32 %v697, %v833
  %v835 = vmul.f32 %v823, 3.8918573e-05
  %v836 = vadd.f32 %v835, 0.001143296
  %v837 = vmul.f32 %v823, %v836
  %v838 = vadd.f32 %v837, 0.014752088
  %v839 = vmul.f32 %v823, %v838
  %v840 = vadd.f32 %v839, 0.112945676
  %v841 = vmul.f32 %v823, %v840
  %v842 = vadd.f32 %v841, 0.4994258
  %v843 = vmul.f32 %v823, %v842
  %v844 = vadd.f32 %v843, 1.0
  %v845 = vrcp.pop %v844
  %v846 = vmul.f32 %v844, %v845
  %v847 = vsub.f32 1.0, %v846
  %v848 = vmul.f32 %v845, %v847
  %v849 = vadd.f32 %v845, %v848
  %vm850 = vweird.f32 %v844
  %vm851 = vweird.f32 %v845
  %vm852 = vmor %vm850, %vm851
  %v853 = vsel %vm852, %v845, %v849
  %v854 = vand.u32 2147483647, %v844
  %vm855 = vcmp.eq.f32.partialorder %v854, 8.507059e+37
  %v856 = vand.u32 %v844, 2147483648
  %v857 = vor.u32 1.1754944e-38, %v856
  %v858 = vsel %vm855, %v857, %v853
  %v859 = vmul.f32 %v834, %v858
  %v860 = vmin.f32 %v859, 1.0
  %v861 = vmax.f32 %v860, -1.0
  %v862 = vmul.f32 %v698, %v698
  %v863 = vmin.f32 16.0, %v862
  %v864 = vmul.f32 %v863, 2.1237322e-06
  %v865 = vadd.f32 %v864, 0.00028619796
  %v866 = vmul.f32 %v863, %v865
  %v867 = vadd.f32 %v866, 0.0036580483
  %v868 = vmul.f32 %v863, %v867
  %v869 = vadd.f32 %v868, 0.05243302
  %v870 = vmul.f32 %v863, %v869
  %v871 = vadd.f32 %v870, 0.18741608
  %v872 = vmul.f32 %v863, %v871
  %v873 = vadd.f32 %v872, 1.1283791
  %v874 = vmul.f32 %v698, %v873
  %v875 = vmul.f32 %v863, 3.8918573e-05
  %v876 = vadd.f32 %v875, 0.001143296
  %v877 = vmul.f32 %v863, %v876
  %v878 = vadd.f32 %v877, 0.014752088
  %v879 = vmul.f32 %v863, %v878
  %v880 = vadd.f32 %v879, 0.112945676
  %v881 = vmul.f32 %v863, %v880
  %v882 = vadd.f32 %v881, 0.4994258
  %v883 = vmul.f32 %v863, %v882
  %v884 = vadd.f32 %v883, 1.0
  %v885 = vrcp.pop %v884
  %v886 = vmul.f32 %v884, %v885
  %v887 = vsub.f32 1.0, %v886
  %v888 = vmul.f32 %v885, %v887
  %v889 = vadd.f32 %v885, %v888
  %vm890 = vweird.f32 %v884
  %vm891 = vweird.f32 %v885
  %vm892 = vmor %vm890, %vm891
  %v893 = vsel %vm892, %v885, %v889
  %v894 = vand.u32 2147483647, %v884
  %vm895 = vcmp.eq.f32.partialorder %v894, 8.507059e+37
  %v896 = vand.u32 %v884, 2147483648
  %v897 = vor.u32 1.1754944e-38, %v896
  %v898 = vsel %vm895, %v897, %v893
  %v899 = vmul.f32 %v874, %v898
  %v900 = vmin.f32 %v899, 1.0
  %v901 = vmax.f32 %v900, -1.0
  %v902 = vmul.f32 %v699, %v699
  %v903 = vmin.f32 16.0, %v902
  %v904 = vmul.f32 %v903, 2.1237322e-06
  %v905 = vadd.f32 %v904, 0.00028619796
  %v906 = vmul.f32 %v903, %v905
  %v907 = vadd.f32 %v906, 0.0036580483
  %v908 = vmul.f32 %v903, %v907
  %v909 = vadd.f32 %v908, 0.05243302
  %v910 = vmul.f32 %v903, %v909
  %v911 = vadd.f32 %v910, 0.18741608
  %v912 = vmul.f32 %v903, %v911
  %v913 = vadd.f32 %v912, 1.1283791
  %v914 = vmul.f32 %v699, %v913
  %v915 = vmul.f32 %v903, 3.8918573e-05
  %v916 = vadd.f32 %v915, 0.001143296
  %v917 = vmul.f32 %v903, %v916
  %v918 = vadd.f32 %v917, 0.014752088
  %v919 = vmul.f32 %v903, %v918
  %v920 = vadd.f32 %v919, 0.112945676
  %v921 = vmul.f32 %v903, %v920
  %v922 = vadd.f32 %v921, 0.4994258
  %v923 = vmul.f32 %v903, %v922
  %v924 = vadd.f32 %v923, 1.0
  %v925 = vrcp.pop %v924
  %v926 = vmul.f32 %v924, %v925
  %v927 = vsub.f32 1.0, %v926
  %v928 = vmul.f32 %v925, %v927
  %v929 = vadd.f32 %v925, %v928
  %vm930 = vweird.f32 %v924
  %vm931 = vweird.f32 %v925
  %vm932 = vmor %vm930, %vm931
  %v933 = vsel %vm932, %v925, %v929
  %v934 = vand.u32 2147483647, %v924
  %vm935 = vcmp.eq.f32.partialorder %v934, 8.507059e+37
  %v936 = vand.u32 %v924, 2147483648
  %v937 = vor.u32 1.1754944e-38, %v936
  %v938 = vsel %vm935, %v937, %v933
  %v939 = vmul.f32 %v914, %v938
  %v940 = vmin.f32 %v939, 1.0
  %v941 = vmax.f32 %v940, -1.0
  %v942 = vmul.f32 %v700, %v700
  %v943 = vmin.f32 16.0, %v942
  %v944 = vmul.f32 %v943, 2.1237322e-06
  %v945 = vadd.f32 %v944, 0.00028619796
  %v946 = vmul.f32 %v943, %v945
  %v947 = vadd.f32 %v946, 0.0036580483
  %v948 = vmul.f32 %v943, %v947
  %v949 = vadd.f32 %v948, 0.05243302
  %v950 = vmul.f32 %v943, %v949
  %v951 = vadd.f32 %v950, 0.18741608
  %v952 = vmul.f32 %v943, %v951
  %v953 = vadd.f32 %v952, 1.1283791
  %v954 = vmul.f32 %v700, %v953
  %v955 = vmul.f32 %v943, 3.8918573e-05
  %v956 = vadd.f32 %v955, 0.001143296
  %v957 = vmul.f32 %v943, %v956
  %v958 = vadd.f32 %v957, 0.014752088
  %v959 = vmul.f32 %v943, %v958
  %v960 = vadd.f32 %v959, 0.112945676
  %v961 = vmul.f32 %v943, %v960
  %v962 = vadd.f32 %v961, 0.4994258
  %v963 = vmul.f32 %v943, %v962
  %v964 = vadd.f32 %v963, 1.0
  %v965 = vrcp.pop %v964
  %v966 = vmul.f32 %v964, %v965
  %v967 = vsub.f32 1.0, %v966
  %v968 = vmul.f32 %v965, %v967
  %v969 = vadd.f32 %v965, %v968
  %vm970 = vweird.f32 %v964
  %vm971 = vweird.f32 %v965
  %vm972 = vmor %vm970, %vm971
  %v973 = vsel %vm972, %v965, %v969
  %v974 = vand.u32 2147483647, %v964
  %vm975 = vcmp.eq.f32.partialorder %v974, 8.507059e+37
  %v976 = vand.u32 %v964, 2147483648
  %v977 = vor.u32 1.1754944e-38, %v976
  %v978 = vsel %vm975, %v977, %v973
  %v979 = vmul.f32 %v954, %v978
  %v980 = vmin.f32 %v979, 1.0
  %v981 = vmax.f32 %v980, -1.0
  %v982 = vmul.f32 %v701, %v701
  %v983 = vmin.f32 16.0, %v982
  %v984 = vmul.f32 %v983, 2.1237322e-06
  %v985 = vadd.f32 %v984, 0.00028619796
  %v986 = vmul.f32 %v983, %v985
  %v987 = vadd.f32 %v986, 0.0036580483
  %v988 = vmul.f32 %v983, %v987
  %v989 = vadd.f32 %v988, 0.05243302
  %v990 = vmul.f32 %v983, %v989
  %v991 = vadd.f32 %v990, 0.18741608
  %v992 = vmul.f32 %v983, %v991
  %v993 = vadd.f32 %v992, 1.1283791
  %v994 = vmul.f32 %v701, %v993
  %v995 = vmul.f32 %v983, 3.8918573e-05
  %v996 = vadd.f32 %v995, 0.001143296
  %v997 = vmul.f32 %v983, %v996
  %v998 = vadd.f32 %v997, 0.014752088
  %v999 = vmul.f32 %v983, %v998
  %v1000 = vadd.f32 %v999, 0.112945676
  %v1001 = vmul.f32 %v983, %v1000
  %v1002 = vadd.f32 %v1001, 0.4994258
  %v1003 = vmul.f32 %v983, %v1002
  %v1004 = vadd.f32 %v1003, 1.0
  %v1005 = vrcp.pop %v1004
  %v1006 = vmul.f32 %v1004, %v1005
  %v1007 = vsub.f32 1.0, %v1006
  %v1008 = vmul.f32 %v1005, %v1007
  %v1009 = vadd.f32 %v1005, %v1008
  %vm1010 = vweird.f32 %v1004
  %vm1011 = vweird.f32 %v1005
  %vm1012 = vmor %vm1010, %vm1011
  %v1013 = vsel %vm1012, %v1005, %v1009
  %v1014 = vand.u32 2147483647, %v1004
  %vm1015 = vcmp.eq.f32.partialorder %v1014, 8.507059e+37
  %v1016 = vand.u32 %v1004, 2147483648
  %v1017 = vor.u32 1.1754944e-38, %v1016
  %v1018 = vsel %vm1015, %v1017, %v1013
  %v1019 = vmul.f32 %v994, %v1018
  %v1020 = vmin.f32 %v1019, 1.0
  %v1021 = vmax.f32 %v1020, -1.0
  %v1022 = vadd.f32 %v741, 1.0
  %v1023 = vadd.f32 %v781, 1.0
  %v1024 = vadd.f32 %v821, 1.0
  %v1025 = vadd.f32 %v861, 1.0
  %v1026 = vadd.f32 %v901, 1.0
  %v1027 = vadd.f32 %v941, 1.0
  %v1028 = vadd.f32 %v981, 1.0
  %v1029 = vadd.f32 %v1021, 1.0
  %v1030 = vmul.f32 %v686, %v1022
  %v1031 = vmul.f32 %v687, %v1023
  %v1032 = vmul.f32 %v688, %v1024
  %v1033 = vmul.f32 %v689, %v1025
  %v1034 = vmul.f32 %v690, %v1026
  %v1035 = vmul.f32 %v691, %v1027
  %v1036 = vmul.f32 %v692, %v1028
  %v1037 = vmul.f32 %v693, %v1029
  %v1038 = vld [vmem:[%s5] sm:$0xff]
  %v1039 = vld [vmem:[%s5 + $0x8] sm:$0xff]
  %v1040 = vld [vmem:[%s6] sm:$0xff]
  %v1041 = vld [vmem:[%s6 + $0x8] sm:$0xff]
  %1043 = vset.pattern.permute.xlu0 0
  %1044 = vperm.xlu0 %1043, %v1040
  %v1045 = vpop.permute.xlu0 %1044
  %1048 = vset.pattern.permute.xlu0 0
  %1049 = vperm.xlu0 %1048, %v1041
  %v1050 = vpop.permute.xlu0 %1049
  %v1053 = vsel %vm620, %v1038, 0
  %v1056 = vsel %vm620, %v1039, 0
  %1058 = vmatpush.msra.mxu0 0.0
  %1059 = vmatpush.msra.mxu0 0.0
  %1060 = vmatpush.msra.mxu0 0.0
  %1061 = vmatpush.msra.mxu0 0.0
  %1062 = vmatpush.msra.mxu0 0.0
  %1063 = vmatpush.msra.mxu0 0.0
  %1064 = vmatpush.msra.mxu0 0.0
  %1065 = vmatpush.msra.mxu0 0.0
  %1066 = vmatpush.msra.mxu0 %v1037
  %1067 = vmatpush.msra.mxu0 %v1036
  %1068 = vmatpush.msra.mxu0 %v1035
  %1069 = vmatpush.msra.mxu0 %v1034
  %1070 = vmatpush.msra.mxu0 %v1033
  %1071 = vmatpush.msra.mxu0 %v1032
  %1072 = vmatpush.msra.mxu0 %v1031
  %1073 = vmatpush.msra.mxu0 %v1030
  %1074 = vmatmul.f32.gmra.mxu0 %v1053
  %v1075 = vpop.f32.mrf.mxu0
  %v1076 = vadd.f32 %v1045, %v1075
  %1077 = vmatmul.f32.gmra.mxu0 %v1056
  %v1078 = vpop.f32.mrf.mxu0
  %v1079 = vadd.f32 %v1050, %v1078
  %1080 = vdwg.mxu0
  %1081 = vst [vmem:[%s7] sm:$0xff] %v1076
  %1082 = vst [vmem:[%s7 + $0x8] sm:$0xff] %v1079
  // Predicated region
  $region30: #{mlp_forward.1} parent=0 // pred_check
    _
  $region31: #{mlp_forward.1} parent=0 // pred_check_branch
    %1084 = sbr.rel (0) target = $region33
  $region32: #{mlp_forward.1} parent=0 // pred_region
    _
  $region33: #{mlp_forward.1} parent=0 // pred_fallthru
    _
  // Predicated region
  $region34: #{mlp_forward.1} parent=0 // pred_check
    _
  $region35: #{mlp_forward.1} parent=0 // pred_check_branch
    %1086 = sbr.rel (0) target = $region37
  $region36: #{mlp_forward.1} parent=0 // pred_region
    _
  $region37: #{mlp_forward.1} parent=0 // pred_fallthru
    _

</llo_original>
